<compile_context>
chip_gen: v5e
topology: v5e:2x2
jax: 0.10.0
libtpu: 0.0.40
codegen_flags: <defaults>
</compile_context>

<pallas_src>
import jax
import jax.numpy as jnp
from jax import lax
from jax.experimental import pallas as pl
from jax.experimental.pallas import tpu as pltpu


def attention_kernel(x_ref, w_ref, b_ref, o_ref):
    x = x_ref[...]                              # (TB, D_in)  native dtype
    w = w_ref[...]                              # (D_out, D_in) native dtype (VMEM-resident)
    b = b_ref[...].astype(jnp.float32)          # (1, D_out)

    # Linear: x @ W^T + b.  Contract x dim 1 with w dim 1 (no transpose materialized),
    # f32 accumulation on the MXU.
    logits = lax.dot_general(
        x, w,
        dimension_numbers=(((1,), (1,)), ((), ())),
        preferred_element_type=jnp.float32,
    ) + b                                        # (TB, D_out) f32

    # Numerically stable softmax over dim=1 (feature axis); exp + reciprocal on the EUP.
    m = jnp.max(logits, axis=1, keepdims=True)
    e = jnp.exp(logits - m)
    s = jnp.sum(e, axis=1, keepdims=True)
    attn = e * pl.reciprocal(s, approx=True)

    # attention_weights * x
    o_ref[...] = (attn * x.astype(jnp.float32)).astype(o_ref.dtype)


def attention_forward(x, w, b, *, block_b: int = 512, vmem_limit_bytes=None):
    """x: (B, D), w: (D, D) PyTorch layout (out, in), b: (D,)  ->  (B, D)"""
    B, D_in = x.shape
    D_out, D_in_w = w.shape
    assert D_in_w == D_in, "weight in_features mismatch"
    assert D_out == D_in, "attention_weights * x requires out_features == in_features"

    b2 = b.reshape(1, D_out)

    # Batch tile: full batch when small, otherwise a multiple-of-8 tile.
    if B <= block_b:
        tb = B
    else:
        tb = max(8, block_b - (block_b % 8))

    pad_b = (-B) % tb
    x_p = jnp.pad(x, ((0, pad_b), (0, 0))) if pad_b else x
    Bp = B + pad_b
    grid = (Bp // tb,)

    if vmem_limit_bytes is None:
        needed = (
            w.size * w.dtype.itemsize          # resident weight
            + b2.size * 4                      # resident bias
            + 4 * tb * D_in * x.dtype.itemsize # double-buffered x + out tiles
            + 8 * tb * D_out * 4               # f32 intermediates headroom
        )
        vmem_limit_bytes = int(min(max(2 * needed, 32 << 20), 64 << 20))

    out = pl.pallas_call(
        attention_kernel,
        out_shape=jax.ShapeDtypeStruct((Bp, D_in), x.dtype),
        grid=grid,
        in_specs=[
            pl.BlockSpec((tb, D_in), lambda i: (i, 0)),     # x: tiled over batch
            pl.BlockSpec((D_out, D_in), lambda i: (0, 0)),  # W: resident in VMEM
            pl.BlockSpec((1, D_out), lambda i: (0, 0)),     # bias: resident in VMEM
        ],
        out_specs=pl.BlockSpec((tb, D_in), lambda i: (i, 0)),
        compiler_params=pltpu.CompilerParams(
            dimension_semantics=("parallel",),              # independent batch tiles
            vmem_limit_bytes=vmem_limit_bytes,
        ),
    )(x_p, w, b2)

    return out[:B] if pad_b else out


def attention_reference(x, w, b):
    logits = x @ w.T + b
    attn = jax.nn.softmax(logits, axis=1)
    return attn * x


if __name__ == "__main__":
    key = jax.random.PRNGKey(0)
    kx, kw, kb = jax.random.split(key, 3)

    B, D = 8, 32  # in_features == out_features == 32

    x = jax.random.normal(kx, (B, D), dtype=jnp.float32)
    # Deterministic parameter init (uniform, roughly PyTorch Linear-style scale)
    bound = 1.0 / (D ** 0.5)
    w = jax.random.uniform(kw, (D, D), minval=-bound, maxval=bound, dtype=jnp.float32)
    b = jax.random.uniform(kb, (D,), minval=-bound, maxval=bound, dtype=jnp.float32)

    out = attention_forward(x, w, b)
    out = jax.block_until_ready(out)

    ref = attention_reference(x, w, b)
    # approx reciprocal (EUP vrcp) introduces a small relative error; tolerance loosened.
    assert jnp.allclose(out, ref, atol=2e-3, rtol=2e-3), "mismatch vs. reference"

    print("KERNEL_OK")
</pallas_src>

<mosaic_0001>
module attributes {stable_mosaic.version = 11 : i64} {
  func.func @attention_kernel(%arg0: i32, %arg1: memref<8x32xf32, #tpu.memory_space<vmem>>, %arg2: memref<32x32xf32, #tpu.memory_space<vmem>>, %arg3: memref<1x32xf32, #tpu.memory_space<vmem>>, %arg4: memref<8x32xf32, #tpu.memory_space<vmem>>) attributes {dimension_semantics = [#tpu.dimension_semantics<parallel>], iteration_bounds = array<i64: 1>, scalar_prefetch = 0 : i64, scratch_operands = 0 : i64, tpu.core_type = #tpu.core_type<tc>, window_params = [{transform_indices = @transform_0, window_bounds = array<i64: 8, 32>}, {pipeline_mode = #tpu.pipeline_mode<synchronous>, transform_indices = @transform_1, window_bounds = array<i64: 32, 32>}, {pipeline_mode = #tpu.pipeline_mode<synchronous>, transform_indices = @transform_2, window_bounds = array<i64: 1, 32>}, {transform_indices = @transform_3, window_bounds = array<i64: 8, 32>}]} {
    %c0 = arith.constant 0 : index
    %c0_0 = arith.constant 0 : index
    %0 = vector.load %arg1[%c0, %c0_0] : memref<8x32xf32, #tpu.memory_space<vmem>>, vector<8x32xf32>
    %c0_1 = arith.constant 0 : index
    %c0_2 = arith.constant 0 : index
    %1 = vector.load %arg2[%c0_1, %c0_2] : memref<32x32xf32, #tpu.memory_space<vmem>>, vector<32x32xf32>
    %c0_3 = arith.constant 0 : index
    %c0_4 = arith.constant 0 : index
    %2 = vector.load %arg3[%c0_3, %c0_4] : memref<1x32xf32, #tpu.memory_space<vmem>>, vector<1x32xf32>
    %cst = arith.constant dense<0.000000e+00> : vector<8x32xf32>
    %3 = tpu.matmul %0, %1, %cst {dimension_numbers = #tpu.dot_dimension_numbers<[1], [1], [0], [0], [0, 0, 1, 0], [], []>} : vector<8x32xf32>, vector<32x32xf32>, vector<8x32xf32> -> vector<8x32xf32>
    %4 = vector.broadcast %2 : vector<1x32xf32> to vector<8x32xf32>
    %5 = arith.addf %3, %4 : vector<8x32xf32>
    %cst_5 = arith.constant dense<0xFF800000> : vector<8xf32>
    %6 = vector.multi_reduction <maximumf>, %5, %cst_5 [1] : vector<8x32xf32> to vector<8xf32>
    %7 = vector.shape_cast %6 : vector<8xf32> to vector<8x1xf32>
    %8 = vector.broadcast %7 : vector<8x1xf32> to vector<8x32xf32>
    %9 = arith.subf %5, %8 : vector<8x32xf32>
    %10 = math.exp %9 : vector<8x32xf32>
    %cst_6 = arith.constant dense<0.000000e+00> : vector<8xf32>
    %11 = vector.multi_reduction <add>, %10, %cst_6 [1] : vector<8x32xf32> to vector<8xf32>
    %12 = vector.shape_cast %11 : vector<8xf32> to vector<8x1xf32>
    %13 = tpu.reciprocal %12 {approx = true} : vector<8x1xf32> -> vector<8x1xf32>
    %14 = vector.broadcast %13 : vector<8x1xf32> to vector<8x32xf32>
    %15 = arith.mulf %10, %14 : vector<8x32xf32>
    %16 = arith.mulf %15, %0 : vector<8x32xf32>
    %c0_7 = arith.constant 0 : index
    %c0_8 = arith.constant 0 : index
    %17 = vector.load %arg4[%c0_7, %c0_8] : memref<8x32xf32, #tpu.memory_space<vmem>>, vector<8x32xf32>
    tpu.vector_store %arg4[%c0_7, %c0_8], %16 {strides = array<i32>} : memref<8x32xf32, #tpu.memory_space<vmem>>, vector<8x32xf32>,
    return
  }
  func.func @transform_0(%arg0: i32) -> (i32, i32) {
    %c0_i32 = arith.constant 0 : i32
    %c0_i32_0 = arith.constant 0 : i32
    return %arg0, %c0_i32 : i32, i32
  }
  func.func @transform_1(%arg0: i32) -> (i32, i32) {
    %c0_i32 = arith.constant 0 : i32
    %c0_i32_0 = arith.constant 0 : i32
    %c0_i32_1 = arith.constant 0 : i32
    return %c0_i32, %c0_i32_0 : i32, i32
  }
  func.func @transform_2(%arg0: i32) -> (i32, i32) {
    %c0_i32 = arith.constant 0 : i32
    %c0_i32_0 = arith.constant 0 : i32
    %c0_i32_1 = arith.constant 0 : i32
    return %c0_i32, %c0_i32_0 : i32, i32
  }
  func.func @transform_3(%arg0: i32) -> (i32, i32) {
    %c0_i32 = arith.constant 0 : i32
    %c0_i32_0 = arith.constant 0 : i32
    return %arg0, %c0_i32 : i32, i32
  }
}

</mosaic_0001>

<llo_original>
// kernel: tpu_custom_call.1
$region0: #{tpu_custom_call.1}
  #allocation0 [shape = 'u32[]', space=smem, size = 0x4, offset = 0x4, fixed_abs, tag = 'smem constant byte address 0x4 - core index']
  #allocation1 [shape = 'u32[72,128]{1,0:T(1,128)}', space=vmem, size = 0x9000, scoped, tag = 'internal scratch']
  %s0 = inlined_call_operand.hbm [shape: f32[8,32], index: 0, kind: input, shape index: {}]
  %s1 = inlined_call_operand.hbm [shape: f32[32,32], index: 1, kind: input, shape index: {}]
  %s2 = inlined_call_operand.vmem [shape: f32[1,32], index: 2, kind: input, shape index: {}]
  %s3 = inlined_call_operand.hbm [shape: f32[8,32], index: 3, kind: output, shape index: {}]
  %s4 = sld [smem:[#allocation0]]
  $region30: #{tpu_custom_call.1} parent=0
    _
  %s6 = ssub.s32 1, %s4
  %s7 = scalar_select 0, %s6, %s4
  $region1: #{tpu_custom_call.1} parent=0
    #allocation2 [shape = 'u8[4096]{0}', space=vmem, size = 0x1000, scoped, tag = 'input window, operand 0, single buffered']
    #allocation3 [shape = 's32[1]{0}', space=sflag, size = 0x4, scoped, tag = 'scoped memory for tpu_custom_call.1']
    #allocation4 [shape = 's32[1]{0}', space=sflag, size = 0x4, scoped, tag = 'scoped memory for tpu_custom_call.1']
    #allocation5 [shape = 'u8[16384]{0}', space=vmem, size = 0x4000, scoped, tag = 'input window, operand 1, single buffered']
    #allocation6 [shape = 's32[1]{0}', space=sflag, size = 0x4, scoped, tag = 'scoped memory for tpu_custom_call.1']
    #allocation7 [shape = 'u8[4096]{0}', space=vmem, size = 0x1000, scoped, tag = 'output window, operand 0, single buffered']
    %8 = vsyncpa [#allocation3], 0
    %9 = vsyncpa [#allocation6], 0
    %10 = vsyncpa [#allocation4], 0
    // Predicated region
    $region2: #{tpu_custom_call.1} parent=1 // pred_check
      _
    $region3: #{tpu_custom_call.1} parent=1 // pred_check_branch
      %12 = sbr.rel (0) target = $region5
    $region4: #{tpu_custom_call.1} parent=1 // pred_region
      %14 = vsyncadd [#allocation3], 0
      %s16 = sshll.u32 %s0, 4
      %s17 = int_to_ptr.hbm [resolvable:$true] %s16
      %s18 = sshll.u32 [#allocation2], 4
      %s19 = int_to_ptr.vmem [resolvable:$true] %s18
      %21 = dma.hbm_to_vmem [thread:$0]  %s17, 128, %s19, [#allocation3]
    $region5: #{tpu_custom_call.1} parent=1 // pred_fallthru
      _
    // Predicated region
    $region6: #{tpu_custom_call.1} parent=1 // pred_check
      _
    $region7: #{tpu_custom_call.1} parent=1 // pred_check_branch
      %23 = sbr.rel (0) target = $region9
    $region8: #{tpu_custom_call.1} parent=1 // pred_region
      %25 = vsyncadd [#allocation6], 0
      %s26 = sshll.u32 %s1, 4
      %s27 = int_to_ptr.hbm [resolvable:$true] %s26
      %s28 = sshll.u32 [#allocation5], 4
      %s29 = int_to_ptr.vmem [resolvable:$true] %s28
      %34 = dma.hbm_to_vmem [thread:$0]  %s27, 512, %s29, [#allocation6], 128, 128, 8
    $region9: #{tpu_custom_call.1} parent=1 // pred_fallthru
      _
    // Predicated region
    $region10: #{tpu_custom_call.1} parent=1 // pred_check
      _
    $region11: #{tpu_custom_call.1} parent=1 // pred_check_branch
      %36 = sbr.rel (0) target = $region13
    $region12: #{tpu_custom_call.1} parent=1 // pred_region
      _
    $region13: #{tpu_custom_call.1} parent=1 // pred_fallthru
      _
    // Predicated region
    $region14: #{tpu_custom_call.1} parent=1 // pred_check
      _
    $region15: #{tpu_custom_call.1} parent=1 // pred_check_branch
      %38 = sbr.rel (0) target = $region17
    $region16: #{tpu_custom_call.1} parent=1 // pred_region
      %40 = dma.done [#allocation3], 128
    $region17: #{tpu_custom_call.1} parent=1 // pred_fallthru
      _
    // Predicated region
    $region18: #{tpu_custom_call.1} parent=1 // pred_check
      _
    $region19: #{tpu_custom_call.1} parent=1 // pred_check_branch
      %42 = sbr.rel (0) target = $region21
    $region20: #{tpu_custom_call.1} parent=1 // pred_region
      %44 = dma.done [#allocation6], 512
    $region21: #{tpu_custom_call.1} parent=1 // pred_fallthru
      _
    %v45 = vld [vmem:[#allocation2] sm:$0xff]
    %v46 = vld [vmem:[#allocation5] sm:$0xff]
    %v47 = vld [vmem:[#allocation5 + $0x8] sm:$0xff]
    %v48 = vld [vmem:[#allocation5 + $0x10] sm:$0xff]
    %v49 = vld [vmem:[#allocation5 + $0x18] sm:$0xff]
    %v50 = vld [vmem:[%s2] sm:$0x1]
    %v52 = vperm.slane %v50, 0
    %vm54 = vcmask 261120
    %v56 = vsel %vm54, %v45, 0
    %v59 = vsel %vm54, %v46, 0
    %v62 = vsel %vm54, %v47, 0
    %v65 = vsel %vm54, %v48, 0
    %v68 = vsel %vm54, %v49, 0
    %70 = vmatpush.xpose.msra.mxu0 0.0
    %71 = vmatpush.xpose.msra.mxu0 0.0
    %72 = vmatpush.xpose.msra.mxu0 0.0
    %73 = vmatpush.xpose.msra.mxu0 0.0
    %74 = vmatpush.xpose.msra.mxu0 0.0
    %75 = vmatpush.xpose.msra.mxu0 0.0
    %76 = vmatpush.xpose.msra.mxu0 0.0
    %77 = vmatpush.xpose.msra.mxu0 0.0
    %78 = vmatpush.xpose.msra.mxu0 0.0
    %79 = vmatpush.xpose.msra.mxu0 0.0
    %80 = vmatpush.xpose.msra.mxu0 0.0
    %81 = vmatpush.xpose.msra.mxu0 0.0
    %82 = vmatpush.xpose.msra.mxu0 %v68
    %83 = vmatpush.xpose.msra.mxu0 %v65
    %84 = vmatpush.xpose.msra.mxu0 %v62
    %85 = vmatpush.xpose.msra.mxu0 %v59
    %86 = vmatmul.f32.gmra.mxu0 %v56
    %v87 = vpop.f32.mrf.mxu0
    %v88 = vadd.f32 %v52, %v87
    %89 = vdwg.mxu0
    %v90 = vsel %vm54, %v88, -inf
    %91 = vmax.xlane.f32.xlu0 %v90
    %v92 = vpop.xlane.xlu0 %91
    %v93 = vsub.f32 %v88, %v92
    %v94 = vmul.f32 %v93, 1.442695
    %v95 = vpow.pop %v94
    %v96 = vsel %vm54, %v95, 0.0
    %97 = vadd.xlane.f32.xlu0 %v96
    %v98 = vpop.xlane.xlu0 %97
    %v99 = vrcp.pop %v98
    %v100 = vmul.f32 %v95, %v99
    %v101 = vmul.f32 %v100, %v45
    %102 = vst.msk [vmem:[#allocation7] sm:$0xff] %vm54, %v101
    // Predicated region
    $region22: #{tpu_custom_call.1} parent=1 // pred_check
      _
    $region23: #{tpu_custom_call.1} parent=1 // pred_check_branch
      %104 = sbr.rel (0) target = $region25
    $region24: #{tpu_custom_call.1} parent=1 // pred_region
      %106 = vsyncadd [#allocation4], 0
      %s108 = sshll.u32 [#allocation7], 4
      %s109 = int_to_ptr.vmem [resolvable:$true] %s108
      %s110 = sshll.u32 %s3, 4
      %s111 = int_to_ptr.hbm [resolvable:$true] %s110
      %113 = dma.vmem_to_hbm [thread:$0]  %s109, 128, %s111, [#allocation4]
    $region25: #{tpu_custom_call.1} parent=1 // pred_fallthru
      _
    // Predicated region
    $region26: #{tpu_custom_call.1} parent=1 // pred_check
      _
    $region27: #{tpu_custom_call.1} parent=1 // pred_check_branch
      %115 = sbr.rel (0) target = $region29
    $region28: #{tpu_custom_call.1} parent=1 // pred_region
      %117 = dma.done [#allocation4], 128
    $region29: #{tpu_custom_call.1} parent=1 // pred_fallthru
      _
    %118 = vsyncpa [#allocation3], 1
    %119 = vsyncpa [#allocation6], 1
    %120 = vsyncpa [#allocation4], 1

</llo_original>
